<compile_context>
chip_gen: v7x
topology: tpu7x:2x2x1
jax: 0.10.0
libtpu: 0.0.40
codegen_flags: <defaults>
</compile_context>

<pallas_src>
import functools

import jax
import jax.numpy as jnp
from jax import lax
from jax.experimental import pallas as pl
from jax.experimental.pallas import tpu as pltpu

LN_EPS = 1e-5  # PyTorch nn.LayerNorm default


def _patch_merge_kernel(xe_ref, xo_ref, we_ref, wo_ref, b_ref, o_ref):
    # xe_ref: (tm, 2C)  [x0|x2]   (even-h rows of each 2x2 patch)
    # xo_ref: (tm, 2C)  [x1|x3]   (odd-h rows)
    # we_ref: (2C, 2C)  gamma-folded, row-permuted reduction weight (even half)
    # wo_ref: (2C, 2C)  gamma-folded, row-permuted reduction weight (odd half)
    # b_ref:  (1, 2C)   beta @ W  (LayerNorm bias folded through the reduction)
    # o_ref:  (tm, 2C)
    xe = xe_ref[...].astype(jnp.float32)
    xo = xo_ref[...].astype(jnp.float32)
    n_feat = xe.shape[-1] + xo.shape[-1]          # 4C
    inv_n = 1.0 / n_feat

    # One-pass LayerNorm statistics over the full 4C feature vector, split
    # across the two slabs (halves the cross-lane reductions vs two-pass).
    s1 = jnp.sum(xe, axis=-1, keepdims=True) + jnp.sum(xo, axis=-1, keepdims=True)
    s2 = (jnp.sum(xe * xe, axis=-1, keepdims=True)
          + jnp.sum(xo * xo, axis=-1, keepdims=True))
    mean = s1 * inv_n
    var = jnp.maximum(s2 * inv_n - mean * mean, 0.0)   # clamp: rounding / pad rows
    rstd = lax.rsqrt(var + LN_EPS)

    # gamma/beta live in we/wo/b, so the normalized activations go straight to
    # the MXU.  Fuse center * rstd * cast so only the mm-dtype operands persist.
    mm_dtype = we_ref.dtype
    ne = ((xe - mean) * rstd).astype(mm_dtype)
    no = ((xo - mean) * rstd).astype(mm_dtype)
    acc = jnp.dot(ne, we_ref[...], preferred_element_type=jnp.float32)
    acc = acc + jnp.dot(no, wo_ref[...], preferred_element_type=jnp.float32)
    o_ref[...] = (acc + b_ref[...]).astype(o_ref.dtype)


def _cdiv(a: int, b: int) -> int:
    return -(-a // b)


def _round_up(a: int, b: int) -> int:
    return _cdiv(a, b) * b


def _pick_tile_and_vmem(M, C, x_itemsize, w_itemsize, out_itemsize):
    """Pick the row tile + scoped-VMEM limit from the device's VMEM capacity."""
    try:
        vmem_cap = int(pltpu.get_tpu_info().vmem_capacity_bytes)
    except Exception:
        vmem_cap = 64 * 1024 * 1024  # conservative fallback (v7x per-core VMEM)
    # v5e/v6e (128 MiB physical) -> 96 MiB scoped; v7x (64 MiB) -> 48 MiB.
    vmem_limit = min(vmem_cap * 3 // 4, 96 * 1024 * 1024)

    C2 = 2 * C
    # Per-row footprint:
    #   * the two activation slabs + the output, double-buffered by the
    #     BlockSpec pipeline,
    #   * ~4 live (tm, 2C) f32-equivalent intermediates inside the body
    #     (f32 slabs, normalized mm-dtype copies, f32 accumulator).
    bytes_per_row = (2 * (2 * C2) * x_itemsize      # xe + xo, double-buffered
                     + 2 * C2 * out_itemsize        # output, double-buffered
                     + 4 * C2 * 4)                  # in-kernel f32 temporaries
    # Weights/bias have constant index_maps and are single-buffered
    # (pl.Buffered(1)) -> count them exactly once.
    const_bytes = 2 * C2 * C2 * w_itemsize + C2 * 4
    budget = int(vmem_limit * 0.8) - const_bytes

    # Sublane-packing alignment: 8 rows f32, 16 rows bf16, 32 rows int8/fp8.
    sub = 8 * max(1, 4 // x_itemsize)
    tm = max(sub, min(512, budget // max(bytes_per_row, 1)))  # 512 ~ 85% roofline
    tm = max(sub, (tm // sub) * sub)

    if M > sub:
        # >= 4 grid steps (>= 2 per v7x TensorCore) so input/output DMAs
        # overlap with compute instead of being fully exposed.
        tm = min(tm, _round_up(_cdiv(M, 4), sub))
        # Prefer 8 steps when that still leaves >= 256-row tiles.
        tm8 = _round_up(_cdiv(M, 8), sub)
        if tm8 >= 256:
            tm = min(tm, tm8)
    return max(sub, tm), int(vmem_limit)


@functools.partial(jax.jit, static_argnames=("input_resolution", "bf16_matmul"))
def patch_merging(x, gamma, beta, weight, *, input_resolution, bf16_matmul=None):
    """x: (B, L, C); gamma/beta: (4C,); weight: (4C, 2C) -> (B, L/4, 2C).

    bf16_matmul: None  -> bf16 MXU operands iff activations are bf16 (exact f32
                          semantics otherwise),
                 True  -> opt-in bf16 MXU operands for f32 activations
                          (big win on v5e / v7x for the large-C stages; changes
                          f32 numerics slightly),
                 False -> force f32 MXU operands.
    """
    H, W = input_resolution
    B, L, C = x.shape
    assert L == H * W, f"expected L == H*W ({H * W}), got {L}"
    assert H % 2 == 0 and W % 2 == 0, f"({H}*{W}) not even"

    M = B * (H // 2) * (W // 2)
    C2, C4 = 2 * C, 4 * C

    if bf16_matmul is None:
        bf16_matmul = x.dtype == jnp.bfloat16
    mm_dtype = jnp.bfloat16 if bf16_matmul else jnp.float32
    mm_itemsize = jnp.dtype(mm_dtype).itemsize

    # --- fused 2x2 gather: two lane-dense slabs instead of an (M, 4C) concat.
    # The reshape is a free metadata change of contiguous x; slicing the
    # h-parity dim yields [x0|x2] (p=0) and [x1|x3] (p=1).
    # TODO(synk): verify in HLO/xprof that allow_input_fusion actually fuses
    # these strided-slice producers into the kernel's input DMA; if not,
    # switch to a single (B*H/2, 2, W/2, 2C) operand split in-kernel.
    xg = x.reshape(B, H // 2, 2, W // 2, C2)
    x_even = xg[:, :, 0, :, :].reshape(M, C2)      # [x0 | x2]
    x_odd = xg[:, :, 1, :, :].reshape(M, C2)       # [x1 | x3]

    # --- fold LayerNorm affine into the reduction; row-permute the weight to
    # match the slab ordering so  out = xe @ We + xo @ Wo == xcat @ W.
    # (Cheap parameter prep; could be cached per parameter set outside the jit.)
    w32 = weight.astype(jnp.float32)
    wg = gamma.astype(jnp.float32)[:, None] * w32                   # gamma fold
    w_even = jnp.concatenate([wg[0:C], wg[2 * C:3 * C]], axis=0)    # rows x0,x2
    w_odd = jnp.concatenate([wg[C:2 * C], wg[3 * C:4 * C]], axis=0) # rows x1,x3
    w_even = w_even.astype(mm_dtype)
    w_odd = w_odd.astype(mm_dtype)
    bias = (beta.astype(jnp.float32) @ w32).reshape(1, C2)          # beta fold

    tm, vmem_limit = _pick_tile_and_vmem(
        M, C, x.dtype.itemsize, mm_itemsize, x.dtype.itemsize)
    grid = _cdiv(M, tm)   # cdiv + masked edge block; never collapse to tm=M

    cost = pl.CostEstimate(
        flops=2 * M * C4 * C2,
        transcendentals=M,  # one rsqrt per output token
        bytes_accessed=(M * C4 * x.dtype.itemsize
                        + 2 * C2 * C2 * mm_itemsize
                        + C2 * 4
                        + M * C2 * x.dtype.itemsize),
    )

    act_spec = pl.BlockSpec((tm, C2), lambda i: (i, 0))
    # Constant index_map -> keep a single resident copy (no double-buffering).
    w_spec = pl.BlockSpec((C2, C2), lambda i: (0, 0), pipeline_mode=pl.Buffered(1))
    b_spec = pl.BlockSpec((1, C2), lambda i: (0, 0), pipeline_mode=pl.Buffered(1))

    # TODO(synk): for stages where 2C < 128 the output stores are lane-masked;
    # packing two row-tiles per 128-lane vreg (or fusing the next layer) would
    # be needed to make them lane-dense.
    out = pl.pallas_call(
        _patch_merge_kernel,
        out_shape=jax.ShapeDtypeStruct((M, C2), x.dtype),
        grid_spec=pltpu.PrefetchScalarGridSpec(
            num_scalar_prefetch=0,
            grid=(grid,),
            in_specs=[
                act_spec,   # x_even slab
                act_spec,   # x_odd slab
                w_spec,     # w_even (resident, single-buffered)
                w_spec,     # w_odd  (resident, single-buffered)
                b_spec,     # folded bias (resident, single-buffered)
            ],
            out_specs=pl.BlockSpec((tm, C2), lambda i: (i, 0)),
        ),
        compiler_params=pltpu.CompilerParams(
            dimension_semantics=("parallel",),
            vmem_limit_bytes=vmem_limit,
            # Let XLA fuse the strided-slice producers of the two activation
            # slabs directly into the kernel's operands (no HBM round trip).
            allow_input_fusion=[True, True, False, False, False],
        ),
        cost_estimate=cost,
    )(x_even, x_odd, w_even, w_odd, bias)

    return out.reshape(B, (H // 2) * (W // 2), C2)


def _reference(x, gamma, beta, weight, input_resolution):
    """Pure-JAX mirror of the PyTorch module (concat -> LayerNorm -> Linear)."""
    H, W = input_resolution
    B, L, C = x.shape
    xg = x.astype(jnp.float32).reshape(B, H, W, C)
    x0 = xg[:, 0::2, 0::2, :]
    x1 = xg[:, 1::2, 0::2, :]
    x2 = xg[:, 0::2, 1::2, :]
    x3 = xg[:, 1::2, 1::2, :]
    xm = jnp.concatenate([x0, x1, x2, x3], axis=-1).reshape(B, -1, 4 * C)
    mean = jnp.mean(xm, axis=-1, keepdims=True)
    var = jnp.mean((xm - mean) ** 2, axis=-1, keepdims=True)
    xn = (xm - mean) / jnp.sqrt(var + LN_EPS) * gamma + beta
    return xn @ weight.astype(jnp.float32)


if __name__ == "__main__":
    # Small, module-consistent shapes: input_resolution=(8, 8), dim=32.
    B = 2
    H, W = 8, 8
    dim = 32
    L = H * W

    key = jax.random.PRNGKey(0)
    kx, kw = jax.random.split(key)

    x = jax.random.normal(kx, (B, L, dim), dtype=jnp.float32)
    # PyTorch default LayerNorm init: gamma = ones, beta = zeros.
    # Linear(4*dim -> 2*dim, bias=False) weight stored as (4C, 2C) so the
    # kernel computes x @ W directly (equivalent to torch's x @ W_t.T).
    gamma = jnp.ones((4 * dim,), dtype=jnp.float32)
    beta = jnp.zeros((4 * dim,), dtype=jnp.float32)
    weight = jax.random.normal(kw, (4 * dim, 2 * dim), dtype=jnp.float32) * 0.02

    ref = _reference(x, gamma, beta, weight, (H, W))

    # 1) Exact f32 path (default).
    out = patch_merging(x, gamma, beta, weight, input_resolution=(H, W))
    out = jax.block_until_ready(out)
    assert out.shape == (B, L // 4, 2 * dim), out.shape
    assert jnp.allclose(out, ref.astype(out.dtype), atol=2e-4, rtol=2e-4), float(
        jnp.max(jnp.abs(out - ref)))

    # 2) Opt-in bf16 MXU operands on f32 activations (v5e/v7x large-C path).
    out_bf = patch_merging(x, gamma, beta, weight, input_resolution=(H, W),
                           bf16_matmul=True)
    out_bf = jax.block_until_ready(out_bf)
    assert jnp.allclose(out_bf, ref, atol=5e-2, rtol=5e-2), float(
        jnp.max(jnp.abs(out_bf - ref)))

    # 3) bf16 activations (bf16 MXU path picked automatically).
    xb = x.astype(jnp.bfloat16)
    out_b = patch_merging(xb, gamma, beta, weight, input_resolution=(H, W))
    out_b = jax.block_until_ready(out_b)
    assert out_b.dtype == jnp.bfloat16
    assert jnp.allclose(out_b.astype(jnp.float32), ref, atol=6e-2, rtol=6e-2), float(
        jnp.max(jnp.abs(out_b.astype(jnp.float32) - ref)))

    print("KERNEL_OK")
</pallas_src>

<mosaic_0001>
module attributes {stable_mosaic.version = 11 : i64} {
  func.func @_patch_merge_kernel(%arg0: i32, %arg1: memref<8x64xf32, #tpu.memory_space<vmem>>, %arg2: memref<8x64xf32, #tpu.memory_space<vmem>>, %arg3: memref<64x64xf32, #tpu.memory_space<vmem>>, %arg4: memref<64x64xf32, #tpu.memory_space<vmem>>, %arg5: memref<1x64xf32, #tpu.memory_space<vmem>>, %arg6: memref<8x64xf32, #tpu.memory_space<vmem>>) attributes {dimension_semantics = [#tpu.dimension_semantics<parallel>], iteration_bounds = array<i64: 4>, scalar_prefetch = 0 : i64, scratch_operands = 0 : i64, tpu.core_type = #tpu.core_type<tc>, window_params = [{transform_indices = @transform_0, window_bounds = array<i64: 8, 64>}, {transform_indices = @transform_1, window_bounds = array<i64: 8, 64>}, {pipeline_mode = #tpu.pipeline_mode<synchronous>, transform_indices = @transform_2, window_bounds = array<i64: 64, 64>}, {pipeline_mode = #tpu.pipeline_mode<synchronous>, transform_indices = @transform_3, window_bounds = array<i64: 64, 64>}, {pipeline_mode = #tpu.pipeline_mode<synchronous>, transform_indices = @transform_4, window_bounds = array<i64: 1, 64>}, {transform_indices = @transform_5, window_bounds = array<i64: 8, 64>}]} {
    %c0 = arith.constant 0 : index
    %c0_0 = arith.constant 0 : index
    %0 = vector.load %arg1[%c0, %c0_0] : memref<8x64xf32, #tpu.memory_space<vmem>>, vector<8x64xf32>
    %c0_1 = arith.constant 0 : index
    %c0_2 = arith.constant 0 : index
    %1 = vector.load %arg2[%c0_1, %c0_2] : memref<8x64xf32, #tpu.memory_space<vmem>>, vector<8x64xf32>
    %cst = arith.constant dense<0.000000e+00> : vector<8xf32>
    %2 = vector.multi_reduction <add>, %0, %cst [1] : vector<8x64xf32> to vector<8xf32>
    %3 = vector.shape_cast %2 : vector<8xf32> to vector<8x1xf32>
    %cst_3 = arith.constant dense<0.000000e+00> : vector<8xf32>
    %4 = vector.multi_reduction <add>, %1, %cst_3 [1] : vector<8x64xf32> to vector<8xf32>
    %5 = vector.shape_cast %4 : vector<8xf32> to vector<8x1xf32>
    %6 = arith.addf %3, %5 : vector<8x1xf32>
    %7 = arith.mulf %0, %0 : vector<8x64xf32>
    %cst_4 = arith.constant dense<0.000000e+00> : vector<8xf32>
    %8 = vector.multi_reduction <add>, %7, %cst_4 [1] : vector<8x64xf32> to vector<8xf32>
    %9 = vector.shape_cast %8 : vector<8xf32> to vector<8x1xf32>
    %10 = arith.mulf %1, %1 : vector<8x64xf32>
    %cst_5 = arith.constant dense<0.000000e+00> : vector<8xf32>
    %11 = vector.multi_reduction <add>, %10, %cst_5 [1] : vector<8x64xf32> to vector<8xf32>
    %12 = vector.shape_cast %11 : vector<8xf32> to vector<8x1xf32>
    %13 = arith.addf %9, %12 : vector<8x1xf32>
    %cst_6 = arith.constant 7.812500e-03 : f32
    %14 = vector.broadcast %cst_6 : f32 to vector<8x1xf32>
    %15 = arith.mulf %6, %14 : vector<8x1xf32>
    %cst_7 = arith.constant 7.812500e-03 : f32
    %16 = vector.broadcast %cst_7 : f32 to vector<8x1xf32>
    %17 = arith.mulf %13, %16 : vector<8x1xf32>
    %18 = arith.mulf %15, %15 : vector<8x1xf32>
    %19 = arith.subf %17, %18 : vector<8x1xf32>
    %cst_8 = arith.constant 0.000000e+00 : f32
    %20 = vector.broadcast %cst_8 : f32 to vector<8x1xf32>
    %21 = arith.maximumf %19, %20 : vector<8x1xf32>
    %cst_9 = arith.constant 9.99999974E-6 : f32
    %22 = vector.broadcast %cst_9 : f32 to vector<8x1xf32>
    %23 = arith.addf %21, %22 : vector<8x1xf32>
    %24 = math.rsqrt %23 : vector<8x1xf32>
    %25 = vector.broadcast %15 : vector<8x1xf32> to vector<8x64xf32>
    %26 = arith.subf %0, %25 : vector<8x64xf32>
    %27 = vector.broadcast %24 : vector<8x1xf32> to vector<8x64xf32>
    %28 = arith.mulf %26, %27 : vector<8x64xf32>
    %29 = vector.broadcast %15 : vector<8x1xf32> to vector<8x64xf32>
    %30 = arith.subf %1, %29 : vector<8x64xf32>
    %31 = vector.broadcast %24 : vector<8x1xf32> to vector<8x64xf32>
    %32 = arith.mulf %30, %31 : vector<8x64xf32>
    %c0_10 = arith.constant 0 : index
    %c0_11 = arith.constant 0 : index
    %33 = vector.load %arg3[%c0_10, %c0_11] : memref<64x64xf32, #tpu.memory_space<vmem>>, vector<64x64xf32>
    %cst_12 = arith.constant dense<0.000000e+00> : vector<8x64xf32>
    %34 = tpu.matmul %28, %33, %cst_12 {dimension_numbers = #tpu.dot_dimension_numbers<[1], [0], [0], [1], [0, 0, 1, 1], [], []>} : vector<8x64xf32>, vector<64x64xf32>, vector<8x64xf32> -> vector<8x64xf32>
    %c0_13 = arith.constant 0 : index
    %c0_14 = arith.constant 0 : index
    %35 = vector.load %arg4[%c0_13, %c0_14] : memref<64x64xf32, #tpu.memory_space<vmem>>, vector<64x64xf32>
    %cst_15 = arith.constant dense<0.000000e+00> : vector<8x64xf32>
    %36 = tpu.matmul %32, %35, %cst_15 {dimension_numbers = #tpu.dot_dimension_numbers<[1], [0], [0], [1], [0, 0, 1, 1], [], []>} : vector<8x64xf32>, vector<64x64xf32>, vector<8x64xf32> -> vector<8x64xf32>
    %37 = arith.addf %34, %36 : vector<8x64xf32>
    %c0_16 = arith.constant 0 : index
    %c0_17 = arith.constant 0 : index
    %38 = vector.load %arg5[%c0_16, %c0_17] : memref<1x64xf32, #tpu.memory_space<vmem>>, vector<1x64xf32>
    %39 = vector.broadcast %38 : vector<1x64xf32> to vector<8x64xf32>
    %40 = arith.addf %37, %39 : vector<8x64xf32>
    %c0_18 = arith.constant 0 : index
    %c0_19 = arith.constant 0 : index
    %41 = vector.load %arg6[%c0_18, %c0_19] : memref<8x64xf32, #tpu.memory_space<vmem>>, vector<8x64xf32>
    tpu.vector_store %arg6[%c0_18, %c0_19], %40 {strides = array<i32>} : memref<8x64xf32, #tpu.memory_space<vmem>>, vector<8x64xf32>,
    return
  }
  func.func @transform_0(%arg0: i32) -> (i32, i32) {
    %c0_i32 = arith.constant 0 : i32
    %c0_i32_0 = arith.constant 0 : i32
    return %arg0, %c0_i32 : i32, i32
  }
  func.func @transform_1(%arg0: i32) -> (i32, i32) {
    %c0_i32 = arith.constant 0 : i32
    %c0_i32_0 = arith.constant 0 : i32
    return %arg0, %c0_i32 : i32, i32
  }
  func.func @transform_2(%arg0: i32) -> (i32, i32) {
    %c0_i32 = arith.constant 0 : i32
    %c0_i32_0 = arith.constant 0 : i32
    %c0_i32_1 = arith.constant 0 : i32
    return %c0_i32, %c0_i32_0 : i32, i32
  }
  func.func @transform_3(%arg0: i32) -> (i32, i32) {
    %c0_i32 = arith.constant 0 : i32
    %c0_i32_0 = arith.constant 0 : i32
    %c0_i32_1 = arith.constant 0 : i32
    return %c0_i32, %c0_i32_0 : i32, i32
  }
  func.func @transform_4(%arg0: i32) -> (i32, i32) {
    %c0_i32 = arith.constant 0 : i32
    %c0_i32_0 = arith.constant 0 : i32
    %c0_i32_1 = arith.constant 0 : i32
    return %c0_i32, %c0_i32_0 : i32, i32
  }
  func.func @transform_5(%arg0: i32) -> (i32, i32) {
    %c0_i32 = arith.constant 0 : i32
    %c0_i32_0 = arith.constant 0 : i32
    return %arg0, %c0_i32 : i32, i32
  }
}

</mosaic_0001>

<llo_original>
// kernel: patch_merging.1
$region0: #{patch_merging.1}
  #allocation0 [shape = 'u32[]', space=smem, size = 0x4, offset = 0x4, fixed_abs, tag = 'smem constant byte address 0x4 - core index']
  #allocation1 [shape = 'u32[144,128]{1,0:T(1,128)}', space=vmem, size = 0x12000, scoped, tag = 'internal scratch']
  %s0 = inlined_call_operand.vmem [shape: f32[32,64], index: 0, kind: input, shape index: {}]
  %s1 = inlined_call_operand.vmem [shape: f32[32,64], index: 1, kind: input, shape index: {}]
  %s2 = inlined_call_operand.vmem [shape: f32[64,64], index: 2, kind: input, shape index: {}]
  %s3 = inlined_call_operand.vmem [shape: f32[64,64], index: 3, kind: input, shape index: {}]
  %s4 = inlined_call_operand.vmem [shape: f32[1,64], index: 4, kind: input, shape index: {}]
  %s5 = inlined_call_operand.hbm [shape: f32[32,64], index: 5, kind: output, shape index: {}]
  %s6 = sld [smem:[#allocation0]]
  $region53: #{patch_merging.1} parent=0
    _
  %s8 = ssub.s32 1, %s6
  %s9 = scalar_select 0, %s8, %s6
  $region1: #{patch_merging.1} parent=0
    #allocation2 [shape = 'u8[8192]{0}', space=vmem, size = 0x2000, scoped, tag = 'output window, operand 0']
    #allocation3 [shape = 's32[2]{0}', space=sflag, size = 0x8, scoped, tag = 'scoped memory for patch_merging.1']
    %10 = vsyncpa [#allocation3], 0
    %s11 = scalar_lea.sflag [#allocation3], 1
    %12 = vsyncpa %s11, 0
    loop: start=0, step=1, limit=6
    $region2: #{patch_merging.1} parent=1 // loop_pre_header
      _
    $region3: #{patch_merging.1} parent=1 // loop_header
      %s14 = sphi 0, %s18
      %p15 = scmp.ge.s32.totalorder %s14, 6
      %s24 = sphi 0, %s26
      %s27 = sphi 0, %s24
      %s28 = sphi 0, %s27
      %s44 = sphi 0, %s28
      %s50 = sphi 0, %s52
      %s53 = sphi 0, %s50
      %s54 = sphi 0, %s53
      %s70 = sphi 0, %s54
      %s74 = sphi 0, %s74
      %s76 = sphi 0, %s74
      %s77 = sphi 0, %s76
      %s91 = sphi 0, %s77
      %s95 = sphi 0, %s95
      %s97 = sphi 0, %s95
      %s98 = sphi 0, %s97
      %s112 = sphi 0, %s98
      %s116 = sphi 0, %s116
      %s118 = sphi 0, %s116
      %s119 = sphi 0, %s118
      %s133 = sphi 0, %s119
      %s139 = sphi 0, %s141
      %s142 = sphi 0, %s139
      %s143 = sphi 0, %s142
      %s159 = sphi 0, %s143
    $region4: #{patch_merging.1} parent=1 // loop_header_branch
      %17 = sbr.rel (%p15) target = $region8
    $region5: #{patch_merging.1} parent=1 // loop_body
      %s19 = ssub.s32 %s14, 1
      %s20 = ssub.s32 %s14, 2
      %s21 = sadd.s32 %s14, 1
      %s22 = ssub.s32 %s14, %s21
      %p23 = scmp.eq.s32.totalorder %s22, 0
      %s25 = sadd.s32 %s24, 1
      %s26 = scalar_select %p23, %s24, %s25
      %p29 = pneg %p23
      %p30 = scmp.eq.s32.totalorder %s14, 3
      %p31 = por %p29, %p30
      %p32 = scmp.ne.s32.totalorder %s24, %s27
      %p33 = scmp.eq.s32.totalorder %s14, 0
      %p34 = por %p32, %p33
      %p35 = scmp.ne.s32.totalorder %s24, %s27
      %p36 = scmp.eq.s32.totalorder %s19, 3
      %p37 = por %p35, %p36
      %p38 = scmp.ne.s32.totalorder %s27, %s28
      %p39 = scmp.eq.s32.totalorder %s19, 0
      %p40 = por %p38, %p39
      %p41 = scmp.ne.s32.totalorder %s27, %s28
      %p42 = scmp.eq.s32.totalorder %s20, 3
      %p43 = por %p41, %p42
      %p45 = scmp.ne.s32.totalorder %s28, %s44
      %p46 = scmp.eq.s32.totalorder %s20, 0
      %p47 = por %p45, %p46
      %s48 = ssub.s32 %s14, %s21
      %p49 = scmp.eq.s32.totalorder %s48, 0
      %s51 = sadd.s32 %s50, 1
      %s52 = scalar_select %p49, %s50, %s51
      %p55 = pneg %p49
      %p56 = scmp.eq.s32.totalorder %s14, 3
      %p57 = por %p55, %p56
      %p58 = scmp.ne.s32.totalorder %s50, %s53
      %p59 = scmp.eq.s32.totalorder %s14, 0
      %p60 = por %p58, %p59
      %p61 = scmp.ne.s32.totalorder %s50, %s53
      %p62 = scmp.eq.s32.totalorder %s19, 3
      %p63 = por %p61, %p62
      %p64 = scmp.ne.s32.totalorder %s53, %s54
      %p65 = scmp.eq.s32.totalorder %s19, 0
      %p66 = por %p64, %p65
      %p67 = scmp.ne.s32.totalorder %s53, %s54
      %p68 = scmp.eq.s32.totalorder %s20, 3
      %p69 = por %p67, %p68
      %p71 = scmp.ne.s32.totalorder %s54, %s70
      %p72 = scmp.eq.s32.totalorder %s20, 0
      %p73 = por %p71, %p72
      %s75 = sadd.s32 %s74, 1
      %p78 = scmp.eq.s32.totalorder %s14, 3
      %p79 = scmp.ne.s32.totalorder %s74, %s76
      %p80 = scmp.eq.s32.totalorder %s14, 0
      %p81 = por %p79, %p80
      %p82 = scmp.ne.s32.totalorder %s74, %s76
      %p83 = scmp.eq.s32.totalorder %s19, 3
      %p84 = por %p82, %p83
      %p85 = scmp.ne.s32.totalorder %s76, %s77
      %p86 = scmp.eq.s32.totalorder %s19, 0
      %p87 = por %p85, %p86
      %p88 = scmp.ne.s32.totalorder %s76, %s77
      %p89 = scmp.eq.s32.totalorder %s20, 3
      %p90 = por %p88, %p89
      %p92 = scmp.ne.s32.totalorder %s77, %s91
      %p93 = scmp.eq.s32.totalorder %s20, 0
      %p94 = por %p92, %p93
      %s96 = sadd.s32 %s95, 1
      %p99 = scmp.eq.s32.totalorder %s14, 3
      %p100 = scmp.ne.s32.totalorder %s95, %s97
      %p101 = scmp.eq.s32.totalorder %s14, 0
      %p102 = por %p100, %p101
      %p103 = scmp.ne.s32.totalorder %s95, %s97
      %p104 = scmp.eq.s32.totalorder %s19, 3
      %p105 = por %p103, %p104
      %p106 = scmp.ne.s32.totalorder %s97, %s98
      %p107 = scmp.eq.s32.totalorder %s19, 0
      %p108 = por %p106, %p107
      %p109 = scmp.ne.s32.totalorder %s97, %s98
      %p110 = scmp.eq.s32.totalorder %s20, 3
      %p111 = por %p109, %p110
      %p113 = scmp.ne.s32.totalorder %s98, %s112
      %p114 = scmp.eq.s32.totalorder %s20, 0
      %p115 = por %p113, %p114
      %s117 = sadd.s32 %s116, 1
      %p120 = scmp.eq.s32.totalorder %s14, 3
      %p121 = scmp.ne.s32.totalorder %s116, %s118
      %p122 = scmp.eq.s32.totalorder %s14, 0
      %p123 = por %p121, %p122
      %p124 = scmp.ne.s32.totalorder %s116, %s118
      %p125 = scmp.eq.s32.totalorder %s19, 3
      %p126 = por %p124, %p125
      %p127 = scmp.ne.s32.totalorder %s118, %s119
      %p128 = scmp.eq.s32.totalorder %s19, 0
      %p129 = por %p127, %p128
      %p130 = scmp.ne.s32.totalorder %s118, %s119
      %p131 = scmp.eq.s32.totalorder %s20, 3
      %p132 = por %p130, %p131
      %p134 = scmp.ne.s32.totalorder %s119, %s133
      %p135 = scmp.eq.s32.totalorder %s20, 0
      %p136 = por %p134, %p135
      %s137 = ssub.s32 %s14, %s21
      %p138 = scmp.eq.s32.totalorder %s137, 0
      %s140 = sadd.s32 %s139, 1
      %s141 = scalar_select %p138, %s139, %s140
      %p144 = pneg %p138
      %p145 = scmp.eq.s32.totalorder %s14, 3
      %p146 = por %p144, %p145
      %p147 = scmp.ne.s32.totalorder %s139, %s142
      %p148 = scmp.eq.s32.totalorder %s14, 0
      %p149 = por %p147, %p148
      %p150 = scmp.ne.s32.totalorder %s139, %s142
      %p151 = scmp.eq.s32.totalorder %s19, 3
      %p152 = por %p150, %p151
      %p153 = scmp.ne.s32.totalorder %s142, %s143
      %p154 = scmp.eq.s32.totalorder %s19, 0
      %p155 = por %p153, %p154
      %p156 = scmp.ne.s32.totalorder %s142, %s143
      %p157 = scmp.eq.s32.totalorder %s20, 3
      %p158 = por %p156, %p157
      %p160 = scmp.ne.s32.totalorder %s143, %s159
      %p161 = scmp.eq.s32.totalorder %s20, 0
      %p162 = por %p160, %p161
      %p163 = scmp.le.s32.totalorder 1, %s14
      %p164 = scmp.lt.s32.totalorder %s14, 5
      %p165 = pnand %p163, %p164
      %p166 = pneg %p165
      // Predicated region
      $region9: #{patch_merging.1} parent=5 // pred_check
        _
      $region10: #{patch_merging.1} parent=5 // pred_check_branch
        %168 = sbr.rel (%p165) target = $region12
      $region11: #{patch_merging.1} parent=5 // pred_region
        %s169 = ssub.s32 %s14, 1
        // Predicated region
        $region13: #{patch_merging.1} parent=11 // pred_check
          %p170 = pneg %p87
        $region14: #{patch_merging.1} parent=11 // pred_check_branch
          %172 = sbr.rel (%p170) target = $region16
        $region15: #{patch_merging.1} parent=11 // pred_region
          _
        $region16: #{patch_merging.1} parent=11 // pred_fallthru
          _
        // Predicated region
        $region17: #{patch_merging.1} parent=11 // pred_check
          %p173 = pneg %p108
        $region18: #{patch_merging.1} parent=11 // pred_check_branch
          %175 = sbr.rel (%p173) target = $region20
        $region19: #{patch_merging.1} parent=11 // pred_region
          _
        $region20: #{patch_merging.1} parent=11 // pred_fallthru
          _
        // Predicated region
        $region21: #{patch_merging.1} parent=11 // pred_check
          %p176 = pneg %p129
        $region22: #{patch_merging.1} parent=11 // pred_check_branch
          %178 = sbr.rel (%p176) target = $region24
        $region23: #{patch_merging.1} parent=11 // pred_region
          _
        $region24: #{patch_merging.1} parent=11 // pred_fallthru
          _
      $region12: #{patch_merging.1} parent=5 // pred_fallthru
        _
      %p179 = scmp.lt.s32.totalorder %s14, 4
      // Predicated region
      $region25: #{patch_merging.1} parent=5 // pred_check
        %p180 = pneg %p179
      $region26: #{patch_merging.1} parent=5 // pred_check_branch
        %182 = sbr.rel (%p180) target = $region28
      $region27: #{patch_merging.1} parent=5 // pred_region
        // Predicated region
        $region29: #{patch_merging.1} parent=27 // pred_check
          %p183 = pneg %p34
        $region30: #{patch_merging.1} parent=27 // pred_check_branch
          %185 = sbr.rel (%p183) target = $region32
        $region31: #{patch_merging.1} parent=27 // pred_region
          %p186 = scmp.lt.s32.totalorder %s14, 3
          %s187 = scalar_select %p186, %s14, 3
          %s188 = smul.addr %s187, 8
          %s189 = scalar_lea.vmem %s0, %s188
        $region32: #{patch_merging.1} parent=27 // pred_fallthru
          _
        // Predicated region
        $region33: #{patch_merging.1} parent=27 // pred_check
          %p190 = pneg %p60
        $region34: #{patch_merging.1} parent=27 // pred_check_branch
          %192 = sbr.rel (%p190) target = $region36
        $region35: #{patch_merging.1} parent=27 // pred_region
          %p193 = scmp.lt.s32.totalorder %s14, 3
          %s194 = scalar_select %p193, %s14, 3
          %s195 = smul.addr %s194, 8
          %s196 = scalar_lea.vmem %s1, %s195
        $region36: #{patch_merging.1} parent=27 // pred_fallthru
          _
      $region28: #{patch_merging.1} parent=5 // pred_fallthru
        _
      %p197 = scmp.le.s32.totalorder 1, %s14
      %p198 = scmp.lt.s32.totalorder %s14, 5
      %p199 = pnand %p197, %p198
      %p200 = pneg %p199
      // Predicated region
      $region37: #{patch_merging.1} parent=5 // pred_check
        _
      $region38: #{patch_merging.1} parent=5 // pred_check_branch
        %202 = sbr.rel (%p199) target = $region40
      $region39: #{patch_merging.1} parent=5 // pred_region
        %s203 = ssub.s32 %s14, 1
        %p204 = scmp.lt.s32.totalorder %s19, 3
        %s205 = scalar_select %p204, %s19, 3
        %s206 = smul.addr %s205, 8
        %s207 = scalar_lea.vmem %s0, %s206
        %p208 = pneg %p40
        %p209 = pneg %p37
        %p210 = scmp.lt.s32.totalorder %s19, 3
        %s211 = scalar_select %p210, %s19, 3
        %s212 = smul.addr %s211, 8
        %s213 = scalar_lea.vmem %s1, %s212
        %p214 = pneg %p66
        %p215 = pneg %p63
        %p216 = pneg %p87
        %p217 = pneg %p84
        %p218 = pneg %p108
        %p219 = pneg %p105
        %p220 = pneg %p129
        %p221 = pneg %p126
        %p222 = pneg %p155
        %p223 = pneg %p152
        %s224 = sand.u32 %s142, 1
        %s225 = scalar_lea.sflag [#allocation3], %s224
        %s226 = sand.u32 %s142, 1
        %s227 = smul.addr %s226, 8
        %s228 = scalar_lea.vmem [#allocation2], %s227
        %p229 = scmp.lt.s32.totalorder %s19, 3
        %s230 = scalar_select %p229, %s19, 3
        %s231 = smul.addr %s230, 8
        %s232 = scalar_lea.vmem %s0, %s231
        %p233 = scmp.lt.s32.totalorder %s19, 3
        %s234 = scalar_select %p233, %s19, 3
        %s235 = smul.addr %s234, 8
        %s236 = scalar_lea.vmem %s1, %s235
        %v237 = vld [vmem:[%s232] sm:$0xff]
        %v238 = vld [vmem:[%s236] sm:$0xff]
        %vm239 = vcmask 523264
        %v240 = vsel %vm239, %v237, 0.0
        %241 = vadd.xlane.f32.xlu0 %v240
        %v242 = vpop.xlane.xlu0 %241
        %v243 = vsel %vm239, %v238, 0.0
        %244 = vadd.xlane.f32.xlu0 %v243
        %v245 = vpop.xlane.xlu0 %244
        %v246 = vadd.f32 %v242, %v245
        %v247 = vmul.f32 %v237, %v237
        %v248 = vsel %vm239, %v247, 0.0
        %249 = vadd.xlane.f32.xlu0 %v248
        %v250 = vpop.xlane.xlu0 %249
        %v251 = vmul.f32 %v238, %v238
        %v252 = vsel %vm239, %v251, 0.0
        %253 = vadd.xlane.f32.xlu0 %v252
        %v254 = vpop.xlane.xlu0 %253
        %v255 = vadd.f32 %v250, %v254
        %v256 = vmul.f32 %v246, 0.0078125
        %v257 = vmul.f32 %v255, 0.0078125
        %v258 = vmul.f32 %v256, %v256
        %v259 = vsub.f32 %v257, %v258
        %v260 = vmax.f32 %v259, 0.0
        %v261 = vadd.f32 %v260, 1e-05
        %v262 = vrsqrt.pop %v261
        %v263 = vsub.f32 %v237, %v256
        %v264 = vmul.f32 %v263, %v262
        %v265 = vsub.f32 %v238, %v256
        %v266 = vmul.f32 %v265, %v262
        %v267 = vld [vmem:[%s2] sm:$0xff]
        %v268 = vld [vmem:[%s2 + $0x8] sm:$0xff]
        %v269 = vld [vmem:[%s2 + $0x10] sm:$0xff]
        %v270 = vld [vmem:[%s2 + $0x18] sm:$0xff]
        %v271 = vld [vmem:[%s2 + $0x20] sm:$0xff]
        %v272 = vld [vmem:[%s2 + $0x28] sm:$0xff]
        %v273 = vld [vmem:[%s2 + $0x30] sm:$0xff]
        %v274 = vld [vmem:[%s2 + $0x38] sm:$0xff]
        %v275 = vld [vmem:[%s3] sm:$0xff]
        %v276 = vld [vmem:[%s3 + $0x8] sm:$0xff]
        %v277 = vld [vmem:[%s3 + $0x10] sm:$0xff]
        %v278 = vld [vmem:[%s3 + $0x18] sm:$0xff]
        %v279 = vld [vmem:[%s3 + $0x20] sm:$0xff]
        %v280 = vld [vmem:[%s3 + $0x28] sm:$0xff]
        %v281 = vld [vmem:[%s3 + $0x30] sm:$0xff]
        %v282 = vld [vmem:[%s3 + $0x38] sm:$0xff]
        %v284 = vsel %vm239, %v266, 0
        %286 = vmatprep.subr.mxu0 0.0
        %287 = vmatpush1.msra.mxu0 %v275
        %288 = vmatprep.subr.mxu0 0.0
        %289 = vmatpush1.msra.mxu0 %v276
        %290 = vmatprep.subr.mxu0 0.0
        %291 = vmatpush1.msra.mxu0 %v277
        %292 = vmatprep.subr.mxu0 0.0
        %293 = vmatpush1.msra.mxu0 %v278
        %294 = vmatprep.subr.mxu0 0.0
        %295 = vmatpush1.msra.mxu0 %v279
        %296 = vmatprep.subr.mxu0 0.0
        %297 = vmatpush1.msra.mxu0 %v280
        %298 = vmatprep.subr.mxu0 0.0
        %299 = vmatpush1.msra.mxu0 %v281
        %300 = vmatprep.subr.mxu0 0.0
        %301 = vmatpush1.msra.mxu0 %v282
        %302 = vmatprep.subr.mxu0 0.0
        %303 = vmatpush1.msra.mxu0 0.0
        %304 = vmatprep.subr.mxu0 0.0
        %305 = vmatpush1.msra.mxu0 0.0
        %306 = vmatprep.subr.mxu0 0.0
        %307 = vmatpush1.msra.mxu0 0.0
        %308 = vmatprep.subr.mxu0 0.0
        %309 = vmatpush1.msra.mxu0 0.0
        %310 = vmatprep.subr.mxu0 0.0
        %311 = vmatpush1.msra.mxu0 0.0
        %312 = vmatprep.subr.mxu0 0.0
        %313 = vmatpush1.msra.mxu0 0.0
        %314 = vmatprep.subr.mxu0 0.0
        %315 = vmatpush1.msra.mxu0 0.0
        %316 = vmatprep.subr.mxu0 0.0
        %317 = vmatpush1.msra.mxu0 0.0
        %318 = vmatprep.subr.mxu0 0.0
        %319 = vmatpush1.msra.mxu0 0.0
        %320 = vmatprep.subr.mxu0 0.0
        %321 = vmatpush1.msra.mxu0 0.0
        %322 = vmatprep.subr.mxu0 0.0
        %323 = vmatpush1.msra.mxu0 0.0
        %324 = vmatprep.subr.mxu0 0.0
        %325 = vmatpush1.msra.mxu0 0.0
        %326 = vmatprep.subr.mxu0 0.0
        %327 = vmatpush1.msra.mxu0 0.0
        %328 = vmatprep.subr.mxu0 0.0
        %329 = vmatpush1.msra.mxu0 0.0
        %330 = vmatprep.subr.mxu0 0.0
        %331 = vmatpush1.msra.mxu0 0.0
        %332 = vmatprep.subr.mxu0 0.0
        %333 = vmatpush1.msra.mxu0 0.0
        %334 = vmatprep.subr.mxu0 0.0
        %335 = vmatpush1.msra.mxu0 0.0
        %336 = vmatprep.subr.mxu0 0.0
        %337 = vmatpush1.msra.mxu0 0.0
        %338 = vmatprep.subr.mxu0 0.0
        %339 = vmatpush1.msra.mxu0 0.0
        %340 = vmatprep.subr.mxu0 0.0
        %341 = vmatpush1.msra.mxu0 0.0
        %342 = vmatprep.subr.mxu0 0.0
        %343 = vmatpush1.msra.mxu0 0.0
        %344 = vmatprep.subr.mxu0 0.0
        %345 = vmatpush1.msra.mxu0 0.0
        %346 = vmatprep.subr.mxu0 0.0
        %347 = vmatpush1.msra.mxu0 0.0
        %348 = vmatprep.subr.mxu0 0.0
        %349 = vmatpush1.msra.mxu0 0.0
        %350 = vmatprep.mubr.f32.mxu0 0.0
        %351 = vmatmul.mubr.f32.gmra.mrb[0].mxu0 %v284
        %v352 = vpop.f32.mrb[0].mxu0
        %v353 = vadd.f32 0.0, %v352
        %v354 = vpop.f32.mrb[0].mxu0
        %355 = vdwg.mxu0
        %v357 = vsel %vm239, %v264, 0
        %359 = vmatprep.subr.mxu0 0.0
        %360 = vmatpush1.msra.mxu0 %v267
        %361 = vmatprep.subr.mxu0 0.0
        %362 = vmatpush1.msra.mxu0 %v268
        %363 = vmatprep.subr.mxu0 0.0
        %364 = vmatpush1.msra.mxu0 %v269
        %365 = vmatprep.subr.mxu0 0.0
        %366 = vmatpush1.msra.mxu0 %v270
        %367 = vmatprep.subr.mxu0 0.0
        %368 = vmatpush1.msra.mxu0 %v271
        %369 = vmatprep.subr.mxu0 0.0
        %370 = vmatpush1.msra.mxu0 %v272
        %371 = vmatprep.subr.mxu0 0.0
        %372 = vmatpush1.msra.mxu0 %v273
        %373 = vmatprep.subr.mxu0 0.0
        %374 = vmatpush1.msra.mxu0 %v274
        %375 = vmatprep.subr.mxu0 0.0
        %376 = vmatpush1.msra.mxu0 0.0
        %377 = vmatprep.subr.mxu0 0.0
        %378 = vmatpush1.msra.mxu0 0.0
        %379 = vmatprep.subr.mxu0 0.0
        %380 = vmatpush1.msra.mxu0 0.0
        %381 = vmatprep.subr.mxu0 0.0
        %382 = vmatpush1.msra.mxu0 0.0
        %383 = vmatprep.subr.mxu0 0.0
        %384 = vmatpush1.msra.mxu0 0.0
        %385 = vmatprep.subr.mxu0 0.0
        %386 = vmatpush1.msra.mxu0 0.0
        %387 = vmatprep.subr.mxu0 0.0
        %388 = vmatpush1.msra.mxu0 0.0
        %389 = vmatprep.subr.mxu0 0.0
        %390 = vmatpush1.msra.mxu0 0.0
        %391 = vmatprep.subr.mxu0 0.0
        %392 = vmatpush1.msra.mxu0 0.0
        %393 = vmatprep.subr.mxu0 0.0
        %394 = vmatpush1.msra.mxu0 0.0
        %395 = vmatprep.subr.mxu0 0.0
        %396 = vmatpush1.msra.mxu0 0.0
        %397 = vmatprep.subr.mxu0 0.0
        %398 = vmatpush1.msra.mxu0 0.0
        %399 = vmatprep.subr.mxu0 0.0
        %400 = vmatpush1.msra.mxu0 0.0
        %401 = vmatprep.subr.mxu0 0.0
        %402 = vmatpush1.msra.mxu0 0.0
        %403 = vmatprep.subr.mxu0 0.0
        %404 = vmatpush1.msra.mxu0 0.0
        %405 = vmatprep.subr.mxu0 0.0
        %406 = vmatpush1.msra.mxu0 0.0
        %407 = vmatprep.subr.mxu0 0.0
        %408 = vmatpush1.msra.mxu0 0.0
        %409 = vmatprep.subr.mxu0 0.0
        %410 = vmatpush1.msra.mxu0 0.0
        %411 = vmatprep.subr.mxu0 0.0
        %412 = vmatpush1.msra.mxu0 0.0
        %413 = vmatprep.subr.mxu0 0.0
        %414 = vmatpush1.msra.mxu0 0.0
        %415 = vmatprep.subr.mxu0 0.0
        %416 = vmatpush1.msra.mxu0 0.0
        %417 = vmatprep.subr.mxu0 0.0
        %418 = vmatpush1.msra.mxu0 0.0
        %419 = vmatprep.subr.mxu0 0.0
        %420 = vmatpush1.msra.mxu0 0.0
        %421 = vmatprep.subr.mxu0 0.0
        %422 = vmatpush1.msra.mxu0 0.0
        %423 = vmatprep.mubr.f32.mxu0 0.0
        %424 = vmatmul.mubr.f32.gmra.mrb[0].mxu0 %v357
        %v425 = vpop.f32.mrb[0].mxu0
        %v426 = vadd.f32 %v353, %v425
        %v427 = vpop.f32.mrb[0].mxu0
        %428 = vdwg.mxu0
        %v429 = vld [vmem:[%s4] sm:$0x1]
        %v431 = vlaneseq
        %v432 = vshrl.u32 %v431, 7
        %v433 = vsub.s32 0, %v432
        %v434 = vrot.slane %v429, %v433
        %v436 = vadd.f32 %v426, %v434
        %437 = vst.msk [vmem:[%s228] sm:$0xff] %vm239, %v436
        %s438 = sand.u32 %s142, 1
        %s439 = scalar_lea.sflag [#allocation3], %s438
        %s440 = sand.u32 %s142, 1
        %s441 = smul.addr %s440, 8
        %s442 = scalar_lea.vmem [#allocation2], %s441
        // Predicated region
        $region41: #{patch_merging.1} parent=39 // pred_check
          %p443 = pneg %p152
        $region42: #{patch_merging.1} parent=39 // pred_check_branch
          %445 = sbr.rel (%p443) target = $region44
        $region43: #{patch_merging.1} parent=39 // pred_region
          %s447 = ssub.s32 128, 128
          %448 = vsyncadd %s439, %s447
          %s449 = smul.addr %s19, 128
          %s450 = scalar_lea.hbm %s5, %s449
          %s452 = sshll.u32 %s442, 4
          %s453 = int_to_ptr.vmem [resolvable:$true] %s452
          %455 = dma.vmem_to_hbm [thread:$0]  %s453, 128, %s450, %s439
        $region44: #{patch_merging.1} parent=39 // pred_fallthru
          _
      $region40: #{patch_merging.1} parent=5 // pred_fallthru
        _
      %p456 = scmp.le.s32.totalorder 2, %s14
      // Predicated region
      $region45: #{patch_merging.1} parent=5 // pred_check
        %p457 = pneg %p456
      $region46: #{patch_merging.1} parent=5 // pred_check_branch
        %459 = sbr.rel (%p457) target = $region48
      $region47: #{patch_merging.1} parent=5 // pred_region
        %s460 = ssub.s32 %s14, 2
        // Predicated region
        $region49: #{patch_merging.1} parent=47 // pred_check
          %p461 = pneg %p158
        $region50: #{patch_merging.1} parent=47 // pred_check_branch
          %463 = sbr.rel (%p461) target = $region52
        $region51: #{patch_merging.1} parent=47 // pred_region
          %s464 = sand.u32 %s143, 1
          %s465 = scalar_lea.sflag [#allocation3], %s464
          %s466 = sand.u32 %s143, 1
          %s467 = smul.addr %s466, 8
          %s468 = scalar_lea.vmem [#allocation2], %s467
          %469 = dma.done %s465, 128
        $region52: #{patch_merging.1} parent=47 // pred_fallthru
          _
      $region48: #{patch_merging.1} parent=5 // pred_fallthru
        _
    $region6: #{patch_merging.1} parent=1 // loop_footer
      %s18 = sadd.s32 1, %s14
    $region7: #{patch_merging.1} parent=1 // loop_footer_branch
      %13 = sbr.rel target = $region3
    $region8: #{patch_merging.1} parent=1 // loop_exit
      _
    %470 = vsyncpa [#allocation3], 1
    %s471 = scalar_lea.sflag [#allocation3], 1
    %472 = vsyncpa %s471, 1

</llo_original>
